<compile_context>
chip_gen: v7x
topology: tpu7x:2x2x1
jax: 0.10.0
libtpu: 0.0.40
codegen_flags: <defaults>
</compile_context>

<pallas_src>
import functools

import jax
import jax.numpy as jnp
from jax.experimental import pallas as pl
from jax.experimental.pallas import tpu as pltpu

HIDDEN1 = 512
HIDDEN2 = 256
LN_EPS = 1e-5
LANE = 128


def _round_up(x, m):
    return (x + m - 1) // m * m


def _choose_batch_tile(B, requested):
    """Pick the batch tile: multiple of 8 (sublane), capped by `requested`
    (VMEM budget), and yielding >=2 grid steps whenever possible so the
    ("parallel",) batch axis can be sharded across v7x's two TensorCores."""
    requested = max(8, (requested // 8) * 8)
    if B <= 8:
        return B                          # single full-dim block (always legal)
    half = _round_up(-(-B // 2), 8)       # balanced 2-way split
    return max(8, min(requested, half))


def _layernorm_onepass(h, gamma, beta, n):
    """LayerNorm over last axis; one pass (sum & sum-of-squares), f32 math."""
    inv_n = jnp.float32(1.0 / n)
    s1 = jnp.sum(h, axis=-1, keepdims=True)
    s2 = jnp.sum(h * h, axis=-1, keepdims=True)
    mu = s1 * inv_n
    var = jnp.maximum(s2 * inv_n - mu * mu, 0.0)
    return (h - mu) * jax.lax.rsqrt(var + LN_EPS) * gamma + beta


def fc_network_kernel(x_ref,
                      w1_ref, p1_ref,
                      w2_ref, p2_ref,
                      w3_ref, b3_ref,
                      o_ref):
    # p1_ref/p2_ref rows: 0 = bias, 1 = LN gamma, 2 = LN beta (all f32).
    mm_dtype = w1_ref.dtype  # bf16 fast path or f32 exact path

    # fc1 -> LayerNorm(512) -> relu   (MXU acc f32; LN/bias/relu math f32)
    h = jnp.dot(x_ref[...].astype(mm_dtype), w1_ref[...],
                preferred_element_type=jnp.float32)
    h = h + p1_ref[0:1, :]
    h = _layernorm_onepass(h, p1_ref[1:2, :], p1_ref[2:3, :], HIDDEN1)
    h = jnp.maximum(h, 0.0)

    # fc2 -> LayerNorm(256) -> relu
    h = jnp.dot(h.astype(mm_dtype), w2_ref[...],
                preferred_element_type=jnp.float32)
    h = h + p2_ref[0:1, :]
    h = _layernorm_onepass(h, p2_ref[1:2, :], p2_ref[2:3, :], HIDDEN2)
    h = jnp.maximum(h, 0.0)

    # output linear (lane-dense: last dim padded to a multiple of 128)
    y = jnp.dot(h.astype(mm_dtype), w3_ref[...],
                preferred_element_type=jnp.float32) + b3_ref[...]
    o_ref[...] = y.astype(o_ref.dtype)


@functools.partial(jax.jit, static_argnames=("batch_tile", "use_bf16_matmul"))
def fc_network_forward(x, params, *, batch_tile=512, use_bf16_matmul=True):
    """x: [B, input_channels] float32. Returns [B, n_actions] float32.

    use_bf16_matmul=True (default) runs MXU operands in bf16 (fast path on
    v5e/v6e/v7x) with f32 accumulation; set False for the exact
    precision='float32' contract of the PyTorch module.
    """
    (w1, b1, g1, be1, w2, b2, g2, be2, w3, b3) = params
    B, C = x.shape
    n_actions = w3.shape[1]
    A_pad = _round_up(n_actions, LANE)

    bt = _choose_batch_tile(B, batch_tile)
    grid = (pl.cdiv(B, bt),)

    # Pack per-feature vectors: row 0 = bias, 1 = gamma, 2 = beta (stay f32).
    p1 = jnp.concatenate([b1, g1, be1], axis=0).astype(jnp.float32)
    p2 = jnp.concatenate([b2, g2, be2], axis=0).astype(jnp.float32)

    # Lane-dense output head: pad W3 / b3 columns with zeros to a 128 multiple.
    if A_pad != n_actions:
        w3_p = jnp.pad(w3, ((0, 0), (0, A_pad - n_actions)))
        b3_p = jnp.pad(b3, ((0, 0), (0, A_pad - n_actions)))
    else:
        w3_p, b3_p = w3, b3
    b3_p = b3_p.astype(jnp.float32)

    mm_dtype = jnp.bfloat16 if use_bf16_matmul else jnp.float32
    w1_m = w1.astype(mm_dtype)
    w2_m = w2.astype(mm_dtype)
    w3_m = w3_p.astype(mm_dtype)

    def full_spec(a):
        # Params are 2-D and block-invariant (constant block index) -> the
        # pipeliner keeps them resident, no per-step re-DMA.
        return pl.BlockSpec(a.shape, lambda i: (0, 0))

    grid_spec = pltpu.PrefetchScalarGridSpec(
        num_scalar_prefetch=0,
        grid=grid,
        in_specs=[
            # x: ragged last block allowed (row-local math; masked out stores).
            pl.BlockSpec((bt, C), lambda i: (i, 0)),
            full_spec(w1_m), full_spec(p1),
            full_spec(w2_m), full_spec(p2),
            full_spec(w3_m), full_spec(b3_p),
        ],
        out_specs=pl.BlockSpec((bt, A_pad), lambda i: (i, 0)),
    )

    out = pl.pallas_call(
        fc_network_kernel,
        out_shape=jax.ShapeDtypeStruct((B, A_pad), jnp.float32),
        grid_spec=grid_spec,
        compiler_params=pltpu.CompilerParams(
            dimension_semantics=("parallel",)),
    )(x.astype(jnp.float32), w1_m, p1, w2_m, p2, w3_m, b3_p)

    return out[:, :n_actions] if A_pad != n_actions else out


def init_params(key, input_channels, n_actions):
    """Deterministic synthetic init.

    Weights are stored transposed ([in, out]) relative to nn.Linear.weight
    ([out, in]) so the kernel computes x @ W directly. Biases / LayerNorm
    params are kept 2-D (1, N) for TPU-friendly layouts.
    """
    ks = jax.random.split(key, 6)
    scale1 = 1.0 / jnp.sqrt(input_channels)
    scale2 = 1.0 / jnp.sqrt(HIDDEN1)
    scale3 = 1.0 / jnp.sqrt(HIDDEN2)
    w1 = jax.random.uniform(ks[0], (input_channels, HIDDEN1), jnp.float32,
                            -scale1, scale1)
    b1 = jax.random.uniform(ks[1], (1, HIDDEN1), jnp.float32, -scale1, scale1)
    w2 = jax.random.uniform(ks[2], (HIDDEN1, HIDDEN2), jnp.float32,
                            -scale2, scale2)
    b2 = jax.random.uniform(ks[3], (1, HIDDEN2), jnp.float32, -scale2, scale2)
    w3 = jax.random.uniform(ks[4], (HIDDEN2, n_actions), jnp.float32,
                            -scale3, scale3)
    b3 = jax.random.uniform(ks[5], (1, n_actions), jnp.float32, -scale3, scale3)
    # LayerNorm affine params: PyTorch default = ones / zeros.
    g1 = jnp.ones((1, HIDDEN1), jnp.float32)
    be1 = jnp.zeros((1, HIDDEN1), jnp.float32)
    g2 = jnp.ones((1, HIDDEN2), jnp.float32)
    be2 = jnp.zeros((1, HIDDEN2), jnp.float32)
    return (w1, b1, g1, be1, w2, b2, g2, be2, w3, b3)


def _layernorm_ref(h, gamma, beta):
    # Canonical two-pass LayerNorm (matches PyTorch semantics).
    mu = jnp.mean(h, axis=-1, keepdims=True)
    var = jnp.mean(jnp.square(h - mu), axis=-1, keepdims=True)
    return (h - mu) * jax.lax.rsqrt(var + LN_EPS) * gamma + beta


def reference_forward(x, params):
    (w1, b1, g1, be1, w2, b2, g2, be2, w3, b3) = params
    h1 = jnp.maximum(_layernorm_ref(x @ w1 + b1, g1, be1), 0.0)
    h2 = jnp.maximum(_layernorm_ref(h1 @ w2 + b2, g2, be2), 0.0)
    return h2 @ w3 + b3


if __name__ == "__main__":
    key = jax.random.PRNGKey(0)
    k_x, k_p, k_x2 = jax.random.split(key, 3)

    batch = 8
    input_channels = 32
    n_actions = 8

    x = jax.random.normal(k_x, (batch, input_channels), jnp.float32)
    params = init_params(k_p, input_channels, n_actions)
    ref = reference_forward(x, params)

    # Default fast path: bf16 MXU operands, f32 accumulation / LN math.
    out = jax.block_until_ready(fc_network_forward(x, params))
    assert out.shape == (batch, n_actions)
    assert jnp.all(jnp.isfinite(out))
    assert jnp.allclose(out, ref, atol=1e-1, rtol=1e-1)

    # Exact float32 path (matches the precision='float32' contract).
    out_f32 = jax.block_until_ready(
        fc_network_forward(x, params, use_bf16_matmul=False))
    assert out_f32.shape == (batch, n_actions)
    assert jnp.allclose(out_f32, ref, atol=1e-4, rtol=1e-4)

    # Larger batch: 2-step "parallel" grid with a ragged last block (no pad).
    x_big = jax.random.normal(k_x2, (200, input_channels), jnp.float32)
    ref_big = reference_forward(x_big, params)
    out_big = jax.block_until_ready(fc_network_forward(x_big, params))
    assert out_big.shape == (200, n_actions)
    assert jnp.all(jnp.isfinite(out_big))
    assert jnp.allclose(out_big, ref_big, atol=1e-1, rtol=1e-1)

    out_big_f32 = jax.block_until_ready(
        fc_network_forward(x_big, params, use_bf16_matmul=False))
    assert jnp.allclose(out_big_f32, ref_big, atol=1e-4, rtol=1e-4)

    print("KERNEL_OK")
</pallas_src>

<mosaic_0001>
module attributes {stable_mosaic.version = 11 : i64} {
  func.func @fc_network_kernel(%arg0: i32, %arg1: memref<8x32xf32, #tpu.memory_space<vmem>>, %arg2: memref<32x512xbf16, #tpu.memory_space<vmem>>, %arg3: memref<3x512xf32, #tpu.memory_space<vmem>>, %arg4: memref<512x256xbf16, #tpu.memory_space<vmem>>, %arg5: memref<3x256xf32, #tpu.memory_space<vmem>>, %arg6: memref<256x128xbf16, #tpu.memory_space<vmem>>, %arg7: memref<1x128xf32, #tpu.memory_space<vmem>>, %arg8: memref<8x128xf32, #tpu.memory_space<vmem>>) attributes {dimension_semantics = [#tpu.dimension_semantics<parallel>], iteration_bounds = array<i64: 1>, scalar_prefetch = 0 : i64, scratch_operands = 0 : i64, tpu.core_type = #tpu.core_type<tc>, window_params = [{transform_indices = @transform_0, window_bounds = array<i64: 8, 32>}, {pipeline_mode = #tpu.pipeline_mode<synchronous>, transform_indices = @transform_1, window_bounds = array<i64: 32, 512>}, {pipeline_mode = #tpu.pipeline_mode<synchronous>, transform_indices = @transform_2, window_bounds = array<i64: 3, 512>}, {pipeline_mode = #tpu.pipeline_mode<synchronous>, transform_indices = @transform_3, window_bounds = array<i64: 512, 256>}, {pipeline_mode = #tpu.pipeline_mode<synchronous>, transform_indices = @transform_4, window_bounds = array<i64: 3, 256>}, {pipeline_mode = #tpu.pipeline_mode<synchronous>, transform_indices = @transform_5, window_bounds = array<i64: 256, 128>}, {pipeline_mode = #tpu.pipeline_mode<synchronous>, transform_indices = @transform_6, window_bounds = array<i64: 1, 128>}, {transform_indices = @transform_7, window_bounds = array<i64: 8, 128>}]} {
    %c0 = arith.constant 0 : index
    %c0_0 = arith.constant 0 : index
    %0 = vector.load %arg1[%c0, %c0_0] : memref<8x32xf32, #tpu.memory_space<vmem>>, vector<8x32xf32>
    %1 = arith.truncf %0 : vector<8x32xf32> to vector<8x32xbf16>
    %c0_1 = arith.constant 0 : index
    %c0_2 = arith.constant 0 : index
    %2 = vector.load %arg2[%c0_1, %c0_2] : memref<32x512xbf16, #tpu.memory_space<vmem>>, vector<32x512xbf16>
    %cst = arith.constant dense<0.000000e+00> : vector<8x512xf32>
    %3 = tpu.matmul %1, %2, %cst {dimension_numbers = #tpu.dot_dimension_numbers<[1], [0], [0], [1], [0, 0, 1, 1], [], []>} : vector<8x32xbf16>, vector<32x512xbf16>, vector<8x512xf32> -> vector<8x512xf32>
    %c0_3 = arith.constant 0 : index
    %c0_4 = arith.constant 0 : index
    %4 = vector.load %arg3[%c0_3, %c0_4] : memref<3x512xf32, #tpu.memory_space<vmem>>, vector<1x512xf32>
    %5 = vector.broadcast %4 : vector<1x512xf32> to vector<8x512xf32>
    %6 = arith.addf %3, %5 : vector<8x512xf32>
    %c1 = arith.constant 1 : index
    %c0_5 = arith.constant 0 : index
    %7 = vector.load %arg3[%c1, %c0_5] : memref<3x512xf32, #tpu.memory_space<vmem>>, vector<1x512xf32>
    %c2 = arith.constant 2 : index
    %c0_6 = arith.constant 0 : index
    %8 = vector.load %arg3[%c2, %c0_6] : memref<3x512xf32, #tpu.memory_space<vmem>>, vector<1x512xf32>
    %cst_7 = arith.constant dense<0.000000e+00> : vector<8xf32>
    %9 = vector.multi_reduction <add>, %6, %cst_7 [1] : vector<8x512xf32> to vector<8xf32>
    %10 = vector.shape_cast %9 : vector<8xf32> to vector<8x1xf32>
    %11 = arith.mulf %6, %6 : vector<8x512xf32>
    %cst_8 = arith.constant dense<0.000000e+00> : vector<8xf32>
    %12 = vector.multi_reduction <add>, %11, %cst_8 [1] : vector<8x512xf32> to vector<8xf32>
    %13 = vector.shape_cast %12 : vector<8xf32> to vector<8x1xf32>
    %cst_9 = arith.constant 0.001953125 : f32
    %14 = vector.broadcast %cst_9 : f32 to vector<8x1xf32>
    %15 = arith.mulf %10, %14 : vector<8x1xf32>
    %cst_10 = arith.constant 0.001953125 : f32
    %16 = vector.broadcast %cst_10 : f32 to vector<8x1xf32>
    %17 = arith.mulf %13, %16 : vector<8x1xf32>
    %18 = arith.mulf %15, %15 : vector<8x1xf32>
    %19 = arith.subf %17, %18 : vector<8x1xf32>
    %cst_11 = arith.constant 0.000000e+00 : f32
    %20 = vector.broadcast %cst_11 : f32 to vector<8x1xf32>
    %21 = arith.maximumf %19, %20 : vector<8x1xf32>
    %22 = vector.broadcast %15 : vector<8x1xf32> to vector<8x512xf32>
    %23 = arith.subf %6, %22 : vector<8x512xf32>
    %cst_12 = arith.constant 9.99999974E-6 : f32
    %24 = vector.broadcast %cst_12 : f32 to vector<8x1xf32>
    %25 = arith.addf %21, %24 : vector<8x1xf32>
    %26 = math.rsqrt %25 : vector<8x1xf32>
    %27 = vector.broadcast %26 : vector<8x1xf32> to vector<8x512xf32>
    %28 = arith.mulf %23, %27 : vector<8x512xf32>
    %29 = vector.broadcast %7 : vector<1x512xf32> to vector<8x512xf32>
    %30 = arith.mulf %28, %29 : vector<8x512xf32>
    %31 = vector.broadcast %8 : vector<1x512xf32> to vector<8x512xf32>
    %32 = arith.addf %30, %31 : vector<8x512xf32>
    %cst_13 = arith.constant 0.000000e+00 : f32
    %33 = vector.broadcast %cst_13 : f32 to vector<8x512xf32>
    %34 = arith.maximumf %32, %33 : vector<8x512xf32>
    %35 = arith.truncf %34 : vector<8x512xf32> to vector<8x512xbf16>
    %c0_14 = arith.constant 0 : index
    %c0_15 = arith.constant 0 : index
    %36 = vector.load %arg4[%c0_14, %c0_15] : memref<512x256xbf16, #tpu.memory_space<vmem>>, vector<512x256xbf16>
    %cst_16 = arith.constant dense<0.000000e+00> : vector<8x256xf32>
    %37 = tpu.matmul %35, %36, %cst_16 {dimension_numbers = #tpu.dot_dimension_numbers<[1], [0], [0], [1], [0, 0, 1, 1], [], []>} : vector<8x512xbf16>, vector<512x256xbf16>, vector<8x256xf32> -> vector<8x256xf32>
    %c0_17 = arith.constant 0 : index
    %c0_18 = arith.constant 0 : index
    %38 = vector.load %arg5[%c0_17, %c0_18] : memref<3x256xf32, #tpu.memory_space<vmem>>, vector<1x256xf32>
    %39 = vector.broadcast %38 : vector<1x256xf32> to vector<8x256xf32>
    %40 = arith.addf %37, %39 : vector<8x256xf32>
    %c1_19 = arith.constant 1 : index
    %c0_20 = arith.constant 0 : index
    %41 = vector.load %arg5[%c1_19, %c0_20] : memref<3x256xf32, #tpu.memory_space<vmem>>, vector<1x256xf32>
    %c2_21 = arith.constant 2 : index
    %c0_22 = arith.constant 0 : index
    %42 = vector.load %arg5[%c2_21, %c0_22] : memref<3x256xf32, #tpu.memory_space<vmem>>, vector<1x256xf32>
    %cst_23 = arith.constant dense<0.000000e+00> : vector<8xf32>
    %43 = vector.multi_reduction <add>, %40, %cst_23 [1] : vector<8x256xf32> to vector<8xf32>
    %44 = vector.shape_cast %43 : vector<8xf32> to vector<8x1xf32>
    %45 = arith.mulf %40, %40 : vector<8x256xf32>
    %cst_24 = arith.constant dense<0.000000e+00> : vector<8xf32>
    %46 = vector.multi_reduction <add>, %45, %cst_24 [1] : vector<8x256xf32> to vector<8xf32>
    %47 = vector.shape_cast %46 : vector<8xf32> to vector<8x1xf32>
    %cst_25 = arith.constant 3.906250e-03 : f32
    %48 = vector.broadcast %cst_25 : f32 to vector<8x1xf32>
    %49 = arith.mulf %44, %48 : vector<8x1xf32>
    %cst_26 = arith.constant 3.906250e-03 : f32
    %50 = vector.broadcast %cst_26 : f32 to vector<8x1xf32>
    %51 = arith.mulf %47, %50 : vector<8x1xf32>
    %52 = arith.mulf %49, %49 : vector<8x1xf32>
    %53 = arith.subf %51, %52 : vector<8x1xf32>
    %cst_27 = arith.constant 0.000000e+00 : f32
    %54 = vector.broadcast %cst_27 : f32 to vector<8x1xf32>
    %55 = arith.maximumf %53, %54 : vector<8x1xf32>
    %56 = vector.broadcast %49 : vector<8x1xf32> to vector<8x256xf32>
    %57 = arith.subf %40, %56 : vector<8x256xf32>
    %cst_28 = arith.constant 9.99999974E-6 : f32
    %58 = vector.broadcast %cst_28 : f32 to vector<8x1xf32>
    %59 = arith.addf %55, %58 : vector<8x1xf32>
    %60 = math.rsqrt %59 : vector<8x1xf32>
    %61 = vector.broadcast %60 : vector<8x1xf32> to vector<8x256xf32>
    %62 = arith.mulf %57, %61 : vector<8x256xf32>
    %63 = vector.broadcast %41 : vector<1x256xf32> to vector<8x256xf32>
    %64 = arith.mulf %62, %63 : vector<8x256xf32>
    %65 = vector.broadcast %42 : vector<1x256xf32> to vector<8x256xf32>
    %66 = arith.addf %64, %65 : vector<8x256xf32>
    %cst_29 = arith.constant 0.000000e+00 : f32
    %67 = vector.broadcast %cst_29 : f32 to vector<8x256xf32>
    %68 = arith.maximumf %66, %67 : vector<8x256xf32>
    %69 = arith.truncf %68 : vector<8x256xf32> to vector<8x256xbf16>
    %c0_30 = arith.constant 0 : index
    %c0_31 = arith.constant 0 : index
    %70 = vector.load %arg6[%c0_30, %c0_31] : memref<256x128xbf16, #tpu.memory_space<vmem>>, vector<256x128xbf16>
    %cst_32 = arith.constant dense<0.000000e+00> : vector<8x128xf32>
    %71 = tpu.matmul %69, %70, %cst_32 {dimension_numbers = #tpu.dot_dimension_numbers<[1], [0], [0], [1], [0, 0, 1, 1], [], []>} : vector<8x256xbf16>, vector<256x128xbf16>, vector<8x128xf32> -> vector<8x128xf32>
    %c0_33 = arith.constant 0 : index
    %c0_34 = arith.constant 0 : index
    %72 = vector.load %arg7[%c0_33, %c0_34] : memref<1x128xf32, #tpu.memory_space<vmem>>, vector<1x128xf32>
    %73 = vector.broadcast %72 : vector<1x128xf32> to vector<8x128xf32>
    %74 = arith.addf %71, %73 : vector<8x128xf32>
    %c0_35 = arith.constant 0 : index
    %c0_36 = arith.constant 0 : index
    %75 = vector.load %arg8[%c0_35, %c0_36] : memref<8x128xf32, #tpu.memory_space<vmem>>, vector<8x128xf32>
    tpu.vector_store %arg8[%c0_35, %c0_36], %74 {strides = array<i32>} : memref<8x128xf32, #tpu.memory_space<vmem>>, vector<8x128xf32>,
    return
  }
  func.func @transform_0(%arg0: i32) -> (i32, i32) {
    %c0_i32 = arith.constant 0 : i32
    %c0_i32_0 = arith.constant 0 : i32
    return %arg0, %c0_i32 : i32, i32
  }
  func.func @transform_1(%arg0: i32) -> (i32, i32) {
    %c0_i32 = arith.constant 0 : i32
    %c0_i32_0 = arith.constant 0 : i32
    %c0_i32_1 = arith.constant 0 : i32
    return %c0_i32, %c0_i32_0 : i32, i32
  }
  func.func @transform_2(%arg0: i32) -> (i32, i32) {
    %c0_i32 = arith.constant 0 : i32
    %c0_i32_0 = arith.constant 0 : i32
    %c0_i32_1 = arith.constant 0 : i32
    return %c0_i32, %c0_i32_0 : i32, i32
  }
  func.func @transform_3(%arg0: i32) -> (i32, i32) {
    %c0_i32 = arith.constant 0 : i32
    %c0_i32_0 = arith.constant 0 : i32
    %c0_i32_1 = arith.constant 0 : i32
    return %c0_i32, %c0_i32_0 : i32, i32
  }
  func.func @transform_4(%arg0: i32) -> (i32, i32) {
    %c0_i32 = arith.constant 0 : i32
    %c0_i32_0 = arith.constant 0 : i32
    %c0_i32_1 = arith.constant 0 : i32
    return %c0_i32, %c0_i32_0 : i32, i32
  }
  func.func @transform_5(%arg0: i32) -> (i32, i32) {
    %c0_i32 = arith.constant 0 : i32
    %c0_i32_0 = arith.constant 0 : i32
    %c0_i32_1 = arith.constant 0 : i32
    return %c0_i32, %c0_i32_0 : i32, i32
  }
  func.func @transform_6(%arg0: i32) -> (i32, i32) {
    %c0_i32 = arith.constant 0 : i32
    %c0_i32_0 = arith.constant 0 : i32
    %c0_i32_1 = arith.constant 0 : i32
    return %c0_i32, %c0_i32_0 : i32, i32
  }
  func.func @transform_7(%arg0: i32) -> (i32, i32) {
    %c0_i32 = arith.constant 0 : i32
    %c0_i32_0 = arith.constant 0 : i32
    return %arg0, %c0_i32 : i32, i32
  }
}

</mosaic_0001>

<llo_original>
// kernel: fc_network_forward.1
$region0: #{fc_network_forward.1}
  #allocation0 [shape = 'u32[]', space=smem, size = 0x4, offset = 0x4, fixed_abs, tag = 'smem constant byte address 0x4 - core index']
  #allocation1 [shape = 'u32[144,128]{1,0:T(1,128)}', space=vmem, size = 0x12000, scoped, tag = 'internal scratch']
  %s0 = inlined_call_operand.vmem [shape: f32[8,32], index: 0, kind: input, shape index: {}]
  %s1 = inlined_call_operand.vmem [shape: bf16[32,512], index: 1, kind: input, shape index: {}]
  %s2 = inlined_call_operand.vmem [shape: f32[3,512], index: 2, kind: input, shape index: {}]
  %s3 = inlined_call_operand.vmem [shape: bf16[512,256], index: 3, kind: input, shape index: {}]
  %s4 = inlined_call_operand.vmem [shape: f32[3,256], index: 4, kind: input, shape index: {}]
  %s5 = inlined_call_operand.vmem [shape: bf16[256,128], index: 5, kind: input, shape index: {}]
  %s6 = inlined_call_operand.vmem [shape: f32[1,128], index: 6, kind: input, shape index: {}]
  %s7 = inlined_call_operand.hbm [shape: f32[8,128], index: 7, kind: output, shape index: {}]
  %s8 = sld [smem:[#allocation0]]
  $region38: #{fc_network_forward.1} parent=0
    _
  %s10 = ssub.s32 1, %s8
  %s11 = scalar_select 0, %s10, %s8
  $region1: #{fc_network_forward.1} parent=0
    #allocation2 [shape = 'u8[4096]{0}', space=vmem, size = 0x1000, scoped, tag = 'output window, operand 0, single buffered']
    #allocation3 [shape = 's32[1]{0}', space=sflag, size = 0x4, scoped, tag = 'scoped memory for fc_network_forward.1']
    %12 = vsyncpa [#allocation3], 0
    // Predicated region
    $region2: #{fc_network_forward.1} parent=1 // pred_check
      _
    $region3: #{fc_network_forward.1} parent=1 // pred_check_branch
      %14 = sbr.rel (0) target = $region5
    $region4: #{fc_network_forward.1} parent=1 // pred_region
      _
    $region5: #{fc_network_forward.1} parent=1 // pred_fallthru
      _
    // Predicated region
    $region6: #{fc_network_forward.1} parent=1 // pred_check
      _
    $region7: #{fc_network_forward.1} parent=1 // pred_check_branch
      %16 = sbr.rel (0) target = $region9
    $region8: #{fc_network_forward.1} parent=1 // pred_region
      _
    $region9: #{fc_network_forward.1} parent=1 // pred_fallthru
      _
    // Predicated region
    $region10: #{fc_network_forward.1} parent=1 // pred_check
      _
    $region11: #{fc_network_forward.1} parent=1 // pred_check_branch
      %18 = sbr.rel (0) target = $region13
    $region12: #{fc_network_forward.1} parent=1 // pred_region
      _
    $region13: #{fc_network_forward.1} parent=1 // pred_fallthru
      _
    // Predicated region
    $region14: #{fc_network_forward.1} parent=1 // pred_check
      _
    $region15: #{fc_network_forward.1} parent=1 // pred_check_branch
      %20 = sbr.rel (0) target = $region17
    $region16: #{fc_network_forward.1} parent=1 // pred_region
      _
    $region17: #{fc_network_forward.1} parent=1 // pred_fallthru
      _
    // Predicated region
    $region18: #{fc_network_forward.1} parent=1 // pred_check
      _
    $region19: #{fc_network_forward.1} parent=1 // pred_check_branch
      %22 = sbr.rel (0) target = $region21
    $region20: #{fc_network_forward.1} parent=1 // pred_region
      _
    $region21: #{fc_network_forward.1} parent=1 // pred_fallthru
      _
    // Predicated region
    $region22: #{fc_network_forward.1} parent=1 // pred_check
      _
    $region23: #{fc_network_forward.1} parent=1 // pred_check_branch
      %24 = sbr.rel (0) target = $region25
    $region24: #{fc_network_forward.1} parent=1 // pred_region
      _
    $region25: #{fc_network_forward.1} parent=1 // pred_fallthru
      _
    // Predicated region
    $region26: #{fc_network_forward.1} parent=1 // pred_check
      _
    $region27: #{fc_network_forward.1} parent=1 // pred_check_branch
      %26 = sbr.rel (0) target = $region29
    $region28: #{fc_network_forward.1} parent=1 // pred_region
      _
    $region29: #{fc_network_forward.1} parent=1 // pred_fallthru
      _
    %v28 = vld [vmem:[%s0] sm:$0xff]
    %v29 = vpack.c.bf16 %v28, %v28
    %v30 = vld [vmem:[%s1] sm:$0xff]
    %v31 = vld [vmem:[%s1 + $0x8] sm:$0xff]
    %v32 = vld [vmem:[%s1 + $0x10] sm:$0xff]
    %v33 = vld [vmem:[%s1 + $0x18] sm:$0xff]
    %v34 = vld [vmem:[%s1 + $0x20] sm:$0xff]
    %v35 = vld [vmem:[%s1 + $0x28] sm:$0xff]
    %v36 = vld [vmem:[%s1 + $0x30] sm:$0xff]
    %v37 = vld [vmem:[%s1 + $0x38] sm:$0xff]
    %v38 = vld [vmem:[%s2] ss:$4 sm:$0xf]
    %v40 = vlaneseq
    %v41 = vshrl.u32 %v40, 7
    %v42 = vsub.s32 0, %v41
    %v43 = vrot.slane %v38, %v42
    %v44 = vlaneseq
    %v45 = vshrl.u32 %v44, 7
    %v46 = vsub.s32 1, %v45
    %v47 = vrot.slane %v38, %v46
    %v48 = vlaneseq
    %v49 = vshrl.u32 %v48, 7
    %v50 = vsub.s32 2, %v49
    %v51 = vrot.slane %v38, %v50
    %v52 = vlaneseq
    %v53 = vshrl.u32 %v52, 7
    %v54 = vsub.s32 3, %v53
    %v55 = vrot.slane %v38, %v54
    %v68 = vunpack.c.l.b16 %v30
    %v69 = vunpack.c.h.b16 %v30
    %v70 = vunpack.c.l.b16 %v31
    %v71 = vunpack.c.h.b16 %v31
    %v72 = vunpack.c.l.b16 %v32
    %v73 = vunpack.c.h.b16 %v32
    %v74 = vunpack.c.l.b16 %v33
    %v75 = vunpack.c.h.b16 %v33
    %v76 = vunpack.c.l.b16 %v34
    %v77 = vunpack.c.h.b16 %v34
    %v78 = vunpack.c.l.b16 %v35
    %v79 = vunpack.c.h.b16 %v35
    %v80 = vunpack.c.l.b16 %v36
    %v81 = vunpack.c.h.b16 %v36
    %v82 = vunpack.c.l.b16 %v37
    %v83 = vunpack.c.h.b16 %v37
    %v84 = vpack.c.b16 %v72, %v68
    %v85 = vpack.c.b16 %v73, %v69
    %v86 = vpack.c.b16 %v74, %v70
    %v87 = vpack.c.b16 %v75, %v71
    %v88 = vpack.c.b16 %v80, %v76
    %v89 = vpack.c.b16 %v81, %v77
    %v90 = vpack.c.b16 %v82, %v78
    %v91 = vpack.c.b16 %v83, %v79
    %vm100 = vcmask 261120
    %v102 = vsel %vm100, %v29, 0
    %104 = vmatprep.subr.bf16.mxu0 %v85
    %105 = vmatpush1.bf16.msra.mxu0 %v84
    %106 = vmatprep.subr.bf16.mxu0 %v89
    %107 = vmatpush1.bf16.msra.mxu0 %v88
    %108 = vmatprep.subr.bf16.mxu0 0
    %109 = vmatpush1.bf16.msra.mxu0 0
    %110 = vmatprep.subr.bf16.mxu0 0
    %111 = vmatpush1.bf16.msra.mxu0 0
    %112 = vmatprep.subr.bf16.mxu0 0
    %113 = vmatpush1.bf16.msra.mxu0 0
    %114 = vmatprep.subr.bf16.mxu0 0
    %115 = vmatpush1.bf16.msra.mxu0 0
    %116 = vmatprep.subr.bf16.mxu0 0
    %117 = vmatpush1.bf16.msra.mxu0 0
    %118 = vmatprep.subr.bf16.mxu0 0
    %119 = vmatpush1.bf16.msra.mxu0 0
    %120 = vmatprep.subr.bf16.mxu0 0
    %121 = vmatpush1.bf16.msra.mxu0 0
    %122 = vmatprep.subr.bf16.mxu0 0
    %123 = vmatpush1.bf16.msra.mxu0 0
    %124 = vmatprep.subr.bf16.mxu0 0
    %125 = vmatpush1.bf16.msra.mxu0 0
    %126 = vmatprep.subr.bf16.mxu0 0
    %127 = vmatpush1.bf16.msra.mxu0 0
    %128 = vmatprep.subr.bf16.mxu0 0
    %129 = vmatpush1.bf16.msra.mxu0 0
    %130 = vmatprep.subr.bf16.mxu0 0
    %131 = vmatpush1.bf16.msra.mxu0 0
    %132 = vmatprep.subr.bf16.mxu0 0
    %133 = vmatpush1.bf16.msra.mxu0 0
    %134 = vmatprep.subr.bf16.mxu0 0
    %135 = vmatpush1.bf16.msra.mxu0 0
    %136 = vmatprep.mubr.bf16.mxu0 0
    %137 = vmatmul.mubr.bf16.gmra.mrb[0].mxu0 %v102
    %v138 = vpop.f32.mrb[0].mxu0
    %v139 = vadd.f32 %v43, %v138
    %v140 = vpop.f32.mrb[0].mxu0
    %v141 = vadd.f32 %v47, %v140
    %v142 = vpop.f32.mrb[0].mxu0
    %v143 = vpop.f32.mrb[0].mxu0
    %144 = vdwg.mxu0
    %145 = vmatprep.subr.bf16.mxu0 %v87
    %146 = vmatpush1.bf16.msra.mxu0 %v86
    %147 = vmatprep.subr.bf16.mxu0 %v91
    %148 = vmatpush1.bf16.msra.mxu0 %v90
    %149 = vmatprep.subr.bf16.mxu0 0
    %150 = vmatpush1.bf16.msra.mxu0 0
    %151 = vmatprep.subr.bf16.mxu0 0
    %152 = vmatpush1.bf16.msra.mxu0 0
    %153 = vmatprep.subr.bf16.mxu0 0
    %154 = vmatpush1.bf16.msra.mxu0 0
    %155 = vmatprep.subr.bf16.mxu0 0
    %156 = vmatpush1.bf16.msra.mxu0 0
    %157 = vmatprep.subr.bf16.mxu0 0
    %158 = vmatpush1.bf16.msra.mxu0 0
    %159 = vmatprep.subr.bf16.mxu0 0
    %160 = vmatpush1.bf16.msra.mxu0 0
    %161 = vmatprep.subr.bf16.mxu0 0
    %162 = vmatpush1.bf16.msra.mxu0 0
    %163 = vmatprep.subr.bf16.mxu0 0
    %164 = vmatpush1.bf16.msra.mxu0 0
    %165 = vmatprep.subr.bf16.mxu0 0
    %166 = vmatpush1.bf16.msra.mxu0 0
    %167 = vmatprep.subr.bf16.mxu0 0
    %168 = vmatpush1.bf16.msra.mxu0 0
    %169 = vmatprep.subr.bf16.mxu0 0
    %170 = vmatpush1.bf16.msra.mxu0 0
    %171 = vmatprep.subr.bf16.mxu0 0
    %172 = vmatpush1.bf16.msra.mxu0 0
    %173 = vmatprep.subr.bf16.mxu0 0
    %174 = vmatpush1.bf16.msra.mxu0 0
    %175 = vmatprep.subr.bf16.mxu0 0
    %176 = vmatpush1.bf16.msra.mxu0 0
    %177 = vmatprep.mubr.bf16.mxu0 0
    %178 = vmatmul.mubr.bf16.gmra.mrb[0].mxu0 %v102
    %v179 = vpop.f32.mrb[0].mxu0
    %v180 = vadd.f32 %v51, %v179
    %v181 = vpop.f32.mrb[0].mxu0
    %v182 = vadd.f32 %v55, %v181
    %v183 = vpop.f32.mrb[0].mxu0
    %v184 = vpop.f32.mrb[0].mxu0
    %185 = vdwg.mxu0
    %s186 = scalar_lea.vmem %s2, 1
    %v187 = vld [vmem:[%s186] ss:$4 sm:$0xf]
    %s188 = scalar_lea.vmem %s2, 2
    %v189 = vld [vmem:[%s188] ss:$4 sm:$0xf]
    %v190 = vadd.f32 %v139, %v141
    %v191 = vadd.f32 %v190, %v180
    %v192 = vadd.f32 %v191, %v182
    %193 = vadd.xlane.f32.xlu0 %v192
    %v194 = vpop.xlane.xlu0 %193
    %v195 = vmul.f32 %v139, %v139
    %v196 = vmul.f32 %v141, %v141
    %v197 = vmul.f32 %v180, %v180
    %v198 = vmul.f32 %v182, %v182
    %v199 = vadd.f32 %v195, %v196
    %v200 = vadd.f32 %v199, %v197
    %v201 = vadd.f32 %v200, %v198
    %202 = vadd.xlane.f32.xlu0 %v201
    %v203 = vpop.xlane.xlu0 %202
    %v204 = vmul.f32 %v194, 0.001953125
    %v205 = vmul.f32 %v203, 0.001953125
    %v206 = vmul.f32 %v204, %v204
    %v207 = vsub.f32 %v205, %v206
    %v208 = vmax.f32 %v207, 0.0
    %v209 = vsub.f32 %v139, %v204
    %v210 = vsub.f32 %v141, %v204
    %v211 = vsub.f32 %v180, %v204
    %v212 = vsub.f32 %v182, %v204
    %v213 = vadd.f32 %v208, 1e-05
    %v214 = vrsqrt.pop %v213
    %v215 = vmul.f32 %v209, %v214
    %v216 = vmul.f32 %v210, %v214
    %v217 = vmul.f32 %v211, %v214
    %v218 = vmul.f32 %v212, %v214
    %v220 = vlaneseq
    %v221 = vshrl.u32 %v220, 7
    %v222 = vsub.s32 0, %v221
    %v223 = vrot.slane %v187, %v222
    %v224 = vlaneseq
    %v225 = vshrl.u32 %v224, 7
    %v226 = vsub.s32 1, %v225
    %v227 = vrot.slane %v187, %v226
    %v228 = vlaneseq
    %v229 = vshrl.u32 %v228, 7
    %v230 = vsub.s32 2, %v229
    %v231 = vrot.slane %v187, %v230
    %v232 = vlaneseq
    %v233 = vshrl.u32 %v232, 7
    %v234 = vsub.s32 3, %v233
    %v235 = vrot.slane %v187, %v234
    %v240 = vmul.f32 %v215, %v223
    %v241 = vmul.f32 %v216, %v227
    %v242 = vmul.f32 %v217, %v231
    %v243 = vmul.f32 %v218, %v235
    %v245 = vlaneseq
    %v246 = vshrl.u32 %v245, 7
    %v247 = vsub.s32 0, %v246
    %v248 = vrot.slane %v189, %v247
    %v249 = vlaneseq
    %v250 = vshrl.u32 %v249, 7
    %v251 = vsub.s32 1, %v250
    %v252 = vrot.slane %v189, %v251
    %v253 = vlaneseq
    %v254 = vshrl.u32 %v253, 7
    %v255 = vsub.s32 2, %v254
    %v256 = vrot.slane %v189, %v255
    %v257 = vlaneseq
    %v258 = vshrl.u32 %v257, 7
    %v259 = vsub.s32 3, %v258
    %v260 = vrot.slane %v189, %v259
    %v265 = vadd.f32 %v240, %v248
    %v266 = vadd.f32 %v241, %v252
    %v267 = vadd.f32 %v242, %v256
    %v268 = vadd.f32 %v243, %v260
    %v269 = vmax.f32 %v265, 0.0
    %v270 = vmax.f32 %v266, 0.0
    %v271 = vmax.f32 %v267, 0.0
    %v272 = vmax.f32 %v268, 0.0
    %v273 = vpack.c.bf16 %v269, %v269
    %v274 = vpack.c.bf16 %v270, %v270
    %v275 = vpack.c.bf16 %v271, %v271
    %v276 = vpack.c.bf16 %v272, %v272
    %v277 = vld [vmem:[%s3] sm:$0xff]
    %v278 = vld [vmem:[%s3 + $0x8] sm:$0xff]
    %v279 = vld [vmem:[%s3 + $0x10] sm:$0xff]
    %v280 = vld [vmem:[%s3 + $0x18] sm:$0xff]
    %v281 = vld [vmem:[%s3 + $0x20] sm:$0xff]
    %v282 = vld [vmem:[%s3 + $0x28] sm:$0xff]
    %v283 = vld [vmem:[%s3 + $0x30] sm:$0xff]
    %v284 = vld [vmem:[%s3 + $0x38] sm:$0xff]
    %v285 = vld [vmem:[%s3 + $0x40] sm:$0xff]
    %v286 = vld [vmem:[%s3 + $0x48] sm:$0xff]
    %v287 = vld [vmem:[%s3 + $0x50] sm:$0xff]
    %v288 = vld [vmem:[%s3 + $0x58] sm:$0xff]
    %v289 = vld [vmem:[%s3 + $0x60] sm:$0xff]
    %v290 = vld [vmem:[%s3 + $0x68] sm:$0xff]
    %v291 = vld [vmem:[%s3 + $0x70] sm:$0xff]
    %v292 = vld [vmem:[%s3 + $0x78] sm:$0xff]
    %v293 = vld [vmem:[%s3 + $0x80] sm:$0xff]
    %v294 = vld [vmem:[%s3 + $0x88] sm:$0xff]
    %v295 = vld [vmem:[%s3 + $0x90] sm:$0xff]
    %v296 = vld [vmem:[%s3 + $0x98] sm:$0xff]
    %v297 = vld [vmem:[%s3 + $0xa0] sm:$0xff]
    %v298 = vld [vmem:[%s3 + $0xa8] sm:$0xff]
    %v299 = vld [vmem:[%s3 + $0xb0] sm:$0xff]
    %v300 = vld [vmem:[%s3 + $0xb8] sm:$0xff]
    %v301 = vld [vmem:[%s3 + $0xc0] sm:$0xff]
    %v302 = vld [vmem:[%s3 + $0xc8] sm:$0xff]
    %v303 = vld [vmem:[%s3 + $0xd0] sm:$0xff]
    %v304 = vld [vmem:[%s3 + $0xd8] sm:$0xff]
    %v305 = vld [vmem:[%s3 + $0xe0] sm:$0xff]
    %v306 = vld [vmem:[%s3 + $0xe8] sm:$0xff]
    %v307 = vld [vmem:[%s3 + $0xf0] sm:$0xff]
    %v308 = vld [vmem:[%s3 + $0xf8] sm:$0xff]
    %v309 = vld [vmem:[%s3 + $0x100] sm:$0xff]
    %v310 = vld [vmem:[%s3 + $0x108] sm:$0xff]
    %v311 = vld [vmem:[%s3 + $0x110] sm:$0xff]
    %v312 = vld [vmem:[%s3 + $0x118] sm:$0xff]
    %v313 = vld [vmem:[%s3 + $0x120] sm:$0xff]
    %v314 = vld [vmem:[%s3 + $0x128] sm:$0xff]
    %v315 = vld [vmem:[%s3 + $0x130] sm:$0xff]
    %v316 = vld [vmem:[%s3 + $0x138] sm:$0xff]
    %v317 = vld [vmem:[%s3 + $0x140] sm:$0xff]
    %v318 = vld [vmem:[%s3 + $0x148] sm:$0xff]
    %v319 = vld [vmem:[%s3 + $0x150] sm:$0xff]
    %v320 = vld [vmem:[%s3 + $0x158] sm:$0xff]
    %v321 = vld [vmem:[%s3 + $0x160] sm:$0xff]
    %v322 = vld [vmem:[%s3 + $0x168] sm:$0xff]
    %v323 = vld [vmem:[%s3 + $0x170] sm:$0xff]
    %v324 = vld [vmem:[%s3 + $0x178] sm:$0xff]
    %v325 = vld [vmem:[%s3 + $0x180] sm:$0xff]
    %v326 = vld [vmem:[%s3 + $0x188] sm:$0xff]
    %v327 = vld [vmem:[%s3 + $0x190] sm:$0xff]
    %v328 = vld [vmem:[%s3 + $0x198] sm:$0xff]
    %v329 = vld [vmem:[%s3 + $0x1a0] sm:$0xff]
    %v330 = vld [vmem:[%s3 + $0x1a8] sm:$0xff]
    %v331 = vld [vmem:[%s3 + $0x1b0] sm:$0xff]
    %v332 = vld [vmem:[%s3 + $0x1b8] sm:$0xff]
    %v333 = vld [vmem:[%s3 + $0x1c0] sm:$0xff]
    %v334 = vld [vmem:[%s3 + $0x1c8] sm:$0xff]
    %v335 = vld [vmem:[%s3 + $0x1d0] sm:$0xff]
    %v336 = vld [vmem:[%s3 + $0x1d8] sm:$0xff]
    %v337 = vld [vmem:[%s3 + $0x1e0] sm:$0xff]
    %v338 = vld [vmem:[%s3 + $0x1e8] sm:$0xff]
    %v339 = vld [vmem:[%s3 + $0x1f0] sm:$0xff]
    %v340 = vld [vmem:[%s3 + $0x1f8] sm:$0xff]
    %v341 = vld [vmem:[%s4] ss:$4 sm:$0x3]
    %v343 = vlaneseq
    %v344 = vshrl.u32 %v343, 7
    %v345 = vsub.s32 0, %v344
    %v346 = vrot.slane %v341, %v345
    %v347 = vlaneseq
    %v348 = vshrl.u32 %v347, 7
    %v349 = vsub.s32 1, %v348
    %v350 = vrot.slane %v341, %v349
    %v417 = vunpack.c.l.b16 %v277
    %v418 = vunpack.c.h.b16 %v277
    %v419 = vunpack.c.l.b16 %v278
    %v420 = vunpack.c.h.b16 %v278
    %v421 = vunpack.c.l.b16 %v279
    %v422 = vunpack.c.h.b16 %v279
    %v423 = vunpack.c.l.b16 %v280
    %v424 = vunpack.c.h.b16 %v280
    %v425 = vunpack.c.l.b16 %v281
    %v426 = vunpack.c.h.b16 %v281
    %v427 = vunpack.c.l.b16 %v282
    %v428 = vunpack.c.h.b16 %v282
    %v429 = vunpack.c.l.b16 %v283
    %v430 = vunpack.c.h.b16 %v283
    %v431 = vunpack.c.l.b16 %v284
    %v432 = vunpack.c.h.b16 %v284
    %v433 = vunpack.c.l.b16 %v285
    %v434 = vunpack.c.h.b16 %v285
    %v435 = vunpack.c.l.b16 %v286
    %v436 = vunpack.c.h.b16 %v286
    %v437 = vunpack.c.l.b16 %v287
    %v438 = vunpack.c.h.b16 %v287
    %v439 = vunpack.c.l.b16 %v288
    %v440 = vunpack.c.h.b16 %v288
    %v441 = vunpack.c.l.b16 %v289
    %v442 = vunpack.c.h.b16 %v289
    %v443 = vunpack.c.l.b16 %v290
    %v444 = vunpack.c.h.b16 %v290
    %v445 = vunpack.c.l.b16 %v291
    %v446 = vunpack.c.h.b16 %v291
    %v447 = vunpack.c.l.b16 %v292
    %v448 = vunpack.c.h.b16 %v292
    %v449 = vunpack.c.l.b16 %v293
    %v450 = vunpack.c.h.b16 %v293
    %v451 = vunpack.c.l.b16 %v294
    %v452 = vunpack.c.h.b16 %v294
    %v453 = vunpack.c.l.b16 %v295
    %v454 = vunpack.c.h.b16 %v295
    %v455 = vunpack.c.l.b16 %v296
    %v456 = vunpack.c.h.b16 %v296
    %v457 = vunpack.c.l.b16 %v297
    %v458 = vunpack.c.h.b16 %v297
    %v459 = vunpack.c.l.b16 %v298
    %v460 = vunpack.c.h.b16 %v298
    %v461 = vunpack.c.l.b16 %v299
    %v462 = vunpack.c.h.b16 %v299
    %v463 = vunpack.c.l.b16 %v300
    %v464 = vunpack.c.h.b16 %v300
    %v465 = vunpack.c.l.b16 %v301
    %v466 = vunpack.c.h.b16 %v301
    %v467 = vunpack.c.l.b16 %v302
    %v468 = vunpack.c.h.b16 %v302
    %v469 = vunpack.c.l.b16 %v303
    %v470 = vunpack.c.h.b16 %v303
    %v471 = vunpack.c.l.b16 %v304
    %v472 = vunpack.c.h.b16 %v304
    %v473 = vunpack.c.l.b16 %v305
    %v474 = vunpack.c.h.b16 %v305
    %v475 = vunpack.c.l.b16 %v306
    %v476 = vunpack.c.h.b16 %v306
    %v477 = vunpack.c.l.b16 %v307
    %v478 = vunpack.c.h.b16 %v307
    %v479 = vunpack.c.l.b16 %v308
    %v480 = vunpack.c.h.b16 %v308
    %v481 = vunpack.c.l.b16 %v309
    %v482 = vunpack.c.h.b16 %v309
    %v483 = vunpack.c.l.b16 %v310
    %v484 = vunpack.c.h.b16 %v310
    %v485 = vunpack.c.l.b16 %v311
    %v486 = vunpack.c.h.b16 %v311
    %v487 = vunpack.c.l.b16 %v312
    %v488 = vunpack.c.h.b16 %v312
    %v489 = vunpack.c.l.b16 %v313
    %v490 = vunpack.c.h.b16 %v313
    %v491 = vunpack.c.l.b16 %v314
    %v492 = vunpack.c.h.b16 %v314
    %v493 = vunpack.c.l.b16 %v315
    %v494 = vunpack.c.h.b16 %v315
    %v495 = vunpack.c.l.b16 %v316
    %v496 = vunpack.c.h.b16 %v316
    %v497 = vunpack.c.l.b16 %v317
    %v498 = vunpack.c.h.b16 %v317
    %v499 = vunpack.c.l.b16 %v318
    %v500 = vunpack.c.h.b16 %v318
    %v501 = vunpack.c.l.b16 %v319
    %v502 = vunpack.c.h.b16 %v319
    %v503 = vunpack.c.l.b16 %v320
    %v504 = vunpack.c.h.b16 %v320
    %v505 = vunpack.c.l.b16 %v321
    %v506 = vunpack.c.h.b16 %v321
    %v507 = vunpack.c.l.b16 %v322
    %v508 = vunpack.c.h.b16 %v322
    %v509 = vunpack.c.l.b16 %v323
    %v510 = vunpack.c.h.b16 %v323
    %v511 = vunpack.c.l.b16 %v324
    %v512 = vunpack.c.h.b16 %v324
    %v513 = vunpack.c.l.b16 %v325
    %v514 = vunpack.c.h.b16 %v325
    %v515 = vunpack.c.l.b16 %v326
    %v516 = vunpack.c.h.b16 %v326
    %v517 = vunpack.c.l.b16 %v327
    %v518 = vunpack.c.h.b16 %v327
    %v519 = vunpack.c.l.b16 %v328
    %v520 = vunpack.c.h.b16 %v328
    %v521 = vunpack.c.l.b16 %v329
    %v522 = vunpack.c.h.b16 %v329
    %v523 = vunpack.c.l.b16 %v330
    %v524 = vunpack.c.h.b16 %v330
    %v525 = vunpack.c.l.b16 %v331
    %v526 = vunpack.c.h.b16 %v331
    %v527 = vunpack.c.l.b16 %v332
    %v528 = vunpack.c.h.b16 %v332
    %v529 = vunpack.c.l.b16 %v333
    %v530 = vunpack.c.h.b16 %v333
    %v531 = vunpack.c.l.b16 %v334
    %v532 = vunpack.c.h.b16 %v334
    %v533 = vunpack.c.l.b16 %v335
    %v534 = vunpack.c.h.b16 %v335
    %v535 = vunpack.c.l.b16 %v336
    %v536 = vunpack.c.h.b16 %v336
    %v537 = vunpack.c.l.b16 %v337
    %v538 = vunpack.c.h.b16 %v337
    %v539 = vunpack.c.l.b16 %v338
    %v540 = vunpack.c.h.b16 %v338
    %v541 = vunpack.c.l.b16 %v339
    %v542 = vunpack.c.h.b16 %v339
    %v543 = vunpack.c.l.b16 %v340
    %v544 = vunpack.c.h.b16 %v340
    %v545 = vpack.c.b16 %v419, %v417
    %v546 = vpack.c.b16 %v420, %v418
    %v547 = vpack.c.b16 %v423, %v421
    %v548 = vpack.c.b16 %v424, %v422
    %v549 = vpack.c.b16 %v427, %v425
    %v550 = vpack.c.b16 %v428, %v426
    %v551 = vpack.c.b16 %v431, %v429
    %v552 = vpack.c.b16 %v432, %v430
    %v553 = vpack.c.b16 %v435, %v433
    %v554 = vpack.c.b16 %v436, %v434
    %v555 = vpack.c.b16 %v439, %v437
    %v556 = vpack.c.b16 %v440, %v438
    %v557 = vpack.c.b16 %v443, %v441
    %v558 = vpack.c.b16 %v444, %v442
    %v559 = vpack.c.b16 %v447, %v445
    %v560 = vpack.c.b16 %v448, %v446
    %v561 = vpack.c.b16 %v451, %v449
    %v562 = vpack.c.b16 %v452, %v450
    %v563 = vpack.c.b16 %v455, %v453
    %v564 = vpack.c.b16 %v456, %v454
    %v565 = vpack.c.b16 %v459, %v457
    %v566 = vpack.c.b16 %v460, %v458
    %v567 = vpack.c.b16 %v463, %v461
    %v568 = vpack.c.b16 %v464, %v462
    %v569 = vpack.c.b16 %v467, %v465
    %v570 = vpack.c.b16 %v468, %v466
    %v571 = vpack.c.b16 %v471, %v469
    %v572 = vpack.c.b16 %v472, %v470
    %v573 = vpack.c.b16 %v475, %v473
    %v574 = vpack.c.b16 %v476, %v474
    %v575 = vpack.c.b16 %v479, %v477
    %v576 = vpack.c.b16 %v480, %v478
    %v577 = vpack.c.b16 %v483, %v481
    %v578 = vpack.c.b16 %v484, %v482
    %v579 = vpack.c.b16 %v487, %v485
    %v580 = vpack.c.b16 %v488, %v486
    %v581 = vpack.c.b16 %v491, %v489
    %v582 = vpack.c.b16 %v492, %v490
    %v583 = vpack.c.b16 %v495, %v493
    %v584 = vpack.c.b16 %v496, %v494
    %v585 = vpack.c.b16 %v499, %v497
    %v586 = vpack.c.b16 %v500, %v498
    %v587 = vpack.c.b16 %v503, %v501
    %v588 = vpack.c.b16 %v504, %v502
    %v589 = vpack.c.b16 %v507, %v505
    %v590 = vpack.c.b16 %v508, %v506
    %v591 = vpack.c.b16 %v511, %v509
    %v592 = vpack.c.b16 %v512, %v510
    %v593 = vpack.c.b16 %v515, %v513
    %v594 = vpack.c.b16 %v516, %v514
    %v595 = vpack.c.b16 %v519, %v517
    %v596 = vpack.c.b16 %v520, %v518
    %v597 = vpack.c.b16 %v523, %v521
    %v598 = vpack.c.b16 %v524, %v522
    %v599 = vpack.c.b16 %v527, %v525
    %v600 = vpack.c.b16 %v528, %v526
    %v601 = vpack.c.b16 %v531, %v529
    %v602 = vpack.c.b16 %v532, %v530
    %v603 = vpack.c.b16 %v535, %v533
    %v604 = vpack.c.b16 %v536, %v534
    %v605 = vpack.c.b16 %v539, %v537
    %v606 = vpack.c.b16 %v540, %v538
    %v607 = vpack.c.b16 %v543, %v541
    %v608 = vpack.c.b16 %v544, %v542
    %673 = vmatprep.subr.bf16.mxu0 %v546
    %674 = vmatpush1.bf16.msra.mxu0 %v545
    %675 = vmatprep.subr.bf16.mxu0 %v548
    %676 = vmatpush1.bf16.msra.mxu0 %v547
    %677 = vmatprep.subr.bf16.mxu0 %v550
    %678 = vmatpush1.bf16.msra.mxu0 %v549
    %679 = vmatprep.subr.bf16.mxu0 %v552
    %680 = vmatpush1.bf16.msra.mxu0 %v551
    %681 = vmatprep.subr.bf16.mxu0 %v554
    %682 = vmatpush1.bf16.msra.mxu0 %v553
    %683 = vmatprep.subr.bf16.mxu0 %v556
    %684 = vmatpush1.bf16.msra.mxu0 %v555
    %685 = vmatprep.subr.bf16.mxu0 %v558
    %686 = vmatpush1.bf16.msra.mxu0 %v557
    %687 = vmatprep.subr.bf16.mxu0 %v560
    %688 = vmatpush1.bf16.msra.mxu0 %v559
    %689 = vmatprep.subr.bf16.mxu0 %v562
    %690 = vmatpush1.bf16.msra.mxu0 %v561
    %691 = vmatprep.subr.bf16.mxu0 %v564
    %692 = vmatpush1.bf16.msra.mxu0 %v563
    %693 = vmatprep.subr.bf16.mxu0 %v566
    %694 = vmatpush1.bf16.msra.mxu0 %v565
    %695 = vmatprep.subr.bf16.mxu0 %v568
    %696 = vmatpush1.bf16.msra.mxu0 %v567
    %697 = vmatprep.subr.bf16.mxu0 %v570
    %698 = vmatpush1.bf16.msra.mxu0 %v569
    %699 = vmatprep.subr.bf16.mxu0 %v572
    %700 = vmatpush1.bf16.msra.mxu0 %v571
    %701 = vmatprep.subr.bf16.mxu0 %v574
    %702 = vmatpush1.bf16.msra.mxu0 %v573
    %703 = vmatprep.subr.bf16.mxu0 %v576
    %704 = vmatpush1.bf16.msra.mxu0 %v575
    %705 = vmatprep.mubr.bf16.mxu0 %v274
    %706 = vmatmul.mubr.bf16.gmra.mrb[0].mxu0 %v273
    %v707 = vpop.f32.mrb[0].mxu0
    %v708 = vadd.f32 %v346, %v707
    %v709 = vpop.f32.mrb[0].mxu0
    %v710 = vadd.f32 %v350, %v709
    %v711 = vpop.f32.mrb[0].mxu0
    %v712 = vpop.f32.mrb[0].mxu0
    %713 = vdwg.mxu0
    %714 = vmatprep.subr.bf16.mxu0 %v578
    %715 = vmatpush1.bf16.msra.mxu0 %v577
    %716 = vmatprep.subr.bf16.mxu0 %v580
    %717 = vmatpush1.bf16.msra.mxu0 %v579
    %718 = vmatprep.subr.bf16.mxu0 %v582
    %719 = vmatpush1.bf16.msra.mxu0 %v581
    %720 = vmatprep.subr.bf16.mxu0 %v584
    %721 = vmatpush1.bf16.msra.mxu0 %v583
    %722 = vmatprep.subr.bf16.mxu0 %v586
    %723 = vmatpush1.bf16.msra.mxu0 %v585
    %724 = vmatprep.subr.bf16.mxu0 %v588
    %725 = vmatpush1.bf16.msra.mxu0 %v587
    %726 = vmatprep.subr.bf16.mxu0 %v590
    %727 = vmatpush1.bf16.msra.mxu0 %v589
    %728 = vmatprep.subr.bf16.mxu0 %v592
    %729 = vmatpush1.bf16.msra.mxu0 %v591
    %730 = vmatprep.subr.bf16.mxu0 %v594
    %731 = vmatpush1.bf16.msra.mxu0 %v593
    %732 = vmatprep.subr.bf16.mxu0 %v596
    %733 = vmatpush1.bf16.msra.mxu0 %v595
    %734 = vmatprep.subr.bf16.mxu0 %v598
    %735 = vmatpush1.bf16.msra.mxu0 %v597
    %736 = vmatprep.subr.bf16.mxu0 %v600
    %737 = vmatpush1.bf16.msra.mxu0 %v599
    %738 = vmatprep.subr.bf16.mxu0 %v602
    %739 = vmatpush1.bf16.msra.mxu0 %v601
    %740 = vmatprep.subr.bf16.mxu0 %v604
    %741 = vmatpush1.bf16.msra.mxu0 %v603
    %742 = vmatprep.subr.bf16.mxu0 %v606
    %743 = vmatpush1.bf16.msra.mxu0 %v605
    %744 = vmatprep.subr.bf16.mxu0 %v608
    %745 = vmatpush1.bf16.msra.mxu0 %v607
    %746 = vmatprep.mubr.bf16.mxu0 %v276
    %747 = vmatmul.mubr.bf16.gmra.mrb[0].mxu0 %v275
    %v748 = vpop.f32.mrb[0].mxu0
    %v749 = vadd.f32 %v708, %v748
    %v750 = vpop.f32.mrb[0].mxu0
    %v751 = vadd.f32 %v710, %v750
    %v752 = vpop.f32.mrb[0].mxu0
    %v753 = vpop.f32.mrb[0].mxu0
    %754 = vdwg.mxu0
    %s755 = scalar_lea.vmem %s4, 1
    %v756 = vld [vmem:[%s755] ss:$4 sm:$0x3]
    %s757 = scalar_lea.vmem %s4, 2
    %v758 = vld [vmem:[%s757] ss:$4 sm:$0x3]
    %v759 = vadd.f32 %v749, %v751
    %760 = vadd.xlane.f32.xlu0 %v759
    %v761 = vpop.xlane.xlu0 %760
    %v762 = vmul.f32 %v749, %v749
    %v763 = vmul.f32 %v751, %v751
    %v764 = vadd.f32 %v762, %v763
    %765 = vadd.xlane.f32.xlu0 %v764
    %v766 = vpop.xlane.xlu0 %765
    %v767 = vmul.f32 %v761, 0.00390625
    %v768 = vmul.f32 %v766, 0.00390625
    %v769 = vmul.f32 %v767, %v767
    %v770 = vsub.f32 %v768, %v769
    %v771 = vmax.f32 %v770, 0.0
    %v772 = vsub.f32 %v749, %v767
    %v773 = vsub.f32 %v751, %v767
    %v774 = vadd.f32 %v771, 1e-05
    %v775 = vrsqrt.pop %v774
    %v776 = vmul.f32 %v772, %v775
    %v777 = vmul.f32 %v773, %v775
    %v779 = vlaneseq
    %v780 = vshrl.u32 %v779, 7
    %v781 = vsub.s32 0, %v780
    %v782 = vrot.slane %v756, %v781
    %v783 = vlaneseq
    %v784 = vshrl.u32 %v783, 7
    %v785 = vsub.s32 1, %v784
    %v786 = vrot.slane %v756, %v785
    %v789 = vmul.f32 %v776, %v782
    %v790 = vmul.f32 %v777, %v786
    %v792 = vlaneseq
    %v793 = vshrl.u32 %v792, 7
    %v794 = vsub.s32 0, %v793
    %v795 = vrot.slane %v758, %v794
    %v796 = vlaneseq
    %v797 = vshrl.u32 %v796, 7
    %v798 = vsub.s32 1, %v797
    %v799 = vrot.slane %v758, %v798
    %v802 = vadd.f32 %v789, %v795
    %v803 = vadd.f32 %v790, %v799
    %v804 = vmax.f32 %v802, 0.0
    %v805 = vmax.f32 %v803, 0.0
    %v806 = vpack.c.bf16 %v804, %v804
    %v807 = vpack.c.bf16 %v805, %v805
    %v808 = vld [vmem:[%s5] sm:$0xf]
    %v809 = vld [vmem:[%s5 + $0x4] sm:$0xf]
    %v810 = vld [vmem:[%s5 + $0x8] sm:$0xf]
    %v811 = vld [vmem:[%s5 + $0xc] sm:$0xf]
    %v812 = vld [vmem:[%s5 + $0x10] sm:$0xf]
    %v813 = vld [vmem:[%s5 + $0x14] sm:$0xf]
    %v814 = vld [vmem:[%s5 + $0x18] sm:$0xf]
    %v815 = vld [vmem:[%s5 + $0x1c] sm:$0xf]
    %v816 = vld [vmem:[%s5 + $0x20] sm:$0xf]
    %v817 = vld [vmem:[%s5 + $0x24] sm:$0xf]
    %v818 = vld [vmem:[%s5 + $0x28] sm:$0xf]
    %v819 = vld [vmem:[%s5 + $0x2c] sm:$0xf]
    %v820 = vld [vmem:[%s5 + $0x30] sm:$0xf]
    %v821 = vld [vmem:[%s5 + $0x34] sm:$0xf]
    %v822 = vld [vmem:[%s5 + $0x38] sm:$0xf]
    %v823 = vld [vmem:[%s5 + $0x3c] sm:$0xf]
    %v824 = vld [vmem:[%s5 + $0x40] sm:$0xf]
    %v825 = vld [vmem:[%s5 + $0x44] sm:$0xf]
    %v826 = vld [vmem:[%s5 + $0x48] sm:$0xf]
    %v827 = vld [vmem:[%s5 + $0x4c] sm:$0xf]
    %v828 = vld [vmem:[%s5 + $0x50] sm:$0xf]
    %v829 = vld [vmem:[%s5 + $0x54] sm:$0xf]
    %v830 = vld [vmem:[%s5 + $0x58] sm:$0xf]
    %v831 = vld [vmem:[%s5 + $0x5c] sm:$0xf]
    %v832 = vld [vmem:[%s5 + $0x60] sm:$0xf]
    %v833 = vld [vmem:[%s5 + $0x64] sm:$0xf]
    %v834 = vld [vmem:[%s5 + $0x68] sm:$0xf]
    %v835 = vld [vmem:[%s5 + $0x6c] sm:$0xf]
    %v836 = vld [vmem:[%s5 + $0x70] sm:$0xf]
    %v837 = vld [vmem:[%s5 + $0x74] sm:$0xf]
    %v838 = vld [vmem:[%s5 + $0x78] sm:$0xf]
    %v839 = vld [vmem:[%s5 + $0x7c] sm:$0xf]
    %v840 = vld [vmem:[%s6] sm:$0x1]
    %v842 = vlaneseq
    %v843 = vshrl.u32 %v842, 7
    %v844 = vsub.s32 0, %v843
    %v845 = vrot.slane %v840, %v844
    %v879 = vunpack.c.l.b16 %v808
    %v880 = vunpack.c.l.b16 %v809
    %v881 = vunpack.c.l.b16 %v810
    %v882 = vunpack.c.l.b16 %v811
    %v883 = vunpack.c.l.b16 %v812
    %v884 = vunpack.c.l.b16 %v813
    %v885 = vunpack.c.l.b16 %v814
    %v886 = vunpack.c.l.b16 %v815
    %v887 = vunpack.c.l.b16 %v816
    %v888 = vunpack.c.l.b16 %v817
    %v889 = vunpack.c.l.b16 %v818
    %v890 = vunpack.c.l.b16 %v819
    %v891 = vunpack.c.l.b16 %v820
    %v892 = vunpack.c.l.b16 %v821
    %v893 = vunpack.c.l.b16 %v822
    %v894 = vunpack.c.l.b16 %v823
    %v895 = vunpack.c.l.b16 %v824
    %v896 = vunpack.c.l.b16 %v825
    %v897 = vunpack.c.l.b16 %v826
    %v898 = vunpack.c.l.b16 %v827
    %v899 = vunpack.c.l.b16 %v828
    %v900 = vunpack.c.l.b16 %v829
    %v901 = vunpack.c.l.b16 %v830
    %v902 = vunpack.c.l.b16 %v831
    %v903 = vunpack.c.l.b16 %v832
    %v904 = vunpack.c.l.b16 %v833
    %v905 = vunpack.c.l.b16 %v834
    %v906 = vunpack.c.l.b16 %v835
    %v907 = vunpack.c.l.b16 %v836
    %v908 = vunpack.c.l.b16 %v837
    %v909 = vunpack.c.l.b16 %v838
    %v910 = vunpack.c.l.b16 %v839
    %v911 = vpack.c.b16 %v880, %v879
    %v912 = vpack.c.b16 %v882, %v881
    %v913 = vpack.c.b16 %v884, %v883
    %v914 = vpack.c.b16 %v886, %v885
    %v915 = vpack.c.b16 %v888, %v887
    %v916 = vpack.c.b16 %v890, %v889
    %v917 = vpack.c.b16 %v892, %v891
    %v918 = vpack.c.b16 %v894, %v893
    %v919 = vpack.c.b16 %v896, %v895
    %v920 = vpack.c.b16 %v898, %v897
    %v921 = vpack.c.b16 %v900, %v899
    %v922 = vpack.c.b16 %v902, %v901
    %v923 = vpack.c.b16 %v904, %v903
    %v924 = vpack.c.b16 %v906, %v905
    %v925 = vpack.c.b16 %v908, %v907
    %v926 = vpack.c.b16 %v910, %v909
    %943 = vmatprep.subr.bf16.mxu0 0
    %944 = vmatpush1.bf16.msra.mxu0 %v911
    %945 = vmatprep.subr.bf16.mxu0 0
    %946 = vmatpush1.bf16.msra.mxu0 %v912
    %947 = vmatprep.subr.bf16.mxu0 0
    %948 = vmatpush1.bf16.msra.mxu0 %v913
    %949 = vmatprep.subr.bf16.mxu0 0
    %950 = vmatpush1.bf16.msra.mxu0 %v914
    %951 = vmatprep.subr.bf16.mxu0 0
    %952 = vmatpush1.bf16.msra.mxu0 %v915
    %953 = vmatprep.subr.bf16.mxu0 0
    %954 = vmatpush1.bf16.msra.mxu0 %v916
    %955 = vmatprep.subr.bf16.mxu0 0
    %956 = vmatpush1.bf16.msra.mxu0 %v917
    %957 = vmatprep.subr.bf16.mxu0 0
    %958 = vmatpush1.bf16.msra.mxu0 %v918
    %959 = vmatprep.subr.bf16.mxu0 0
    %960 = vmatpush1.bf16.msra.mxu0 %v919
    %961 = vmatprep.subr.bf16.mxu0 0
    %962 = vmatpush1.bf16.msra.mxu0 %v920
    %963 = vmatprep.subr.bf16.mxu0 0
    %964 = vmatpush1.bf16.msra.mxu0 %v921
    %965 = vmatprep.subr.bf16.mxu0 0
    %966 = vmatpush1.bf16.msra.mxu0 %v922
    %967 = vmatprep.subr.bf16.mxu0 0
    %968 = vmatpush1.bf16.msra.mxu0 %v923
    %969 = vmatprep.subr.bf16.mxu0 0
    %970 = vmatpush1.bf16.msra.mxu0 %v924
    %971 = vmatprep.subr.bf16.mxu0 0
    %972 = vmatpush1.bf16.msra.mxu0 %v925
    %973 = vmatprep.subr.bf16.mxu0 0
    %974 = vmatpush1.bf16.msra.mxu0 %v926
    %975 = vmatprep.mubr.bf16.mxu0 %v807
    %976 = vmatmul.mubr.bf16.gmra.mrb[0].mxu0 %v806
    %v977 = vpop.f32.mrb[0].mxu0
    %v978 = vadd.f32 %v845, %v977
    %v979 = vpop.f32.mrb[0].mxu0
    %v980 = vpop.f32.mrb[0].mxu0
    %v981 = vpop.f32.mrb[0].mxu0
    %982 = vdwg.mxu0
    %983 = vst [vmem:[#allocation2] sm:$0xff] %v978
    // Predicated region
    $region30: #{fc_network_forward.1} parent=1 // pred_check
      _
    $region31: #{fc_network_forward.1} parent=1 // pred_check_branch
      %985 = sbr.rel (0) target = $region33
    $region32: #{fc_network_forward.1} parent=1 // pred_region
      %s987 = ssub.s32 128, 128
      %988 = vsyncadd [#allocation3], %s987
      %s990 = sshll.u32 [#allocation2], 4
      %s991 = int_to_ptr.vmem [resolvable:$true] %s990
      %993 = dma.vmem_to_hbm [thread:$0]  %s991, 128, %s7, [#allocation3]
    $region33: #{fc_network_forward.1} parent=1 // pred_fallthru
      _
    // Predicated region
    $region34: #{fc_network_forward.1} parent=1 // pred_check
      _
    $region35: #{fc_network_forward.1} parent=1 // pred_check_branch
      %995 = sbr.rel (0) target = $region37
    $region36: #{fc_network_forward.1} parent=1 // pred_region
      %996 = dma.done [#allocation3], 128
    $region37: #{fc_network_forward.1} parent=1 // pred_fallthru
      _
    %997 = vsyncpa [#allocation3], 1

</llo_original>
